<compile_context>
chip_gen: v7x
topology: tpu7x:2x2x1
jax: 0.10.0
libtpu: 0.0.40
codegen_flags: <defaults>
</compile_context>

<pallas_src>
import functools

import jax
import jax.numpy as jnp
from jax.experimental import pallas as pl
from jax.experimental.pallas import tpu as pltpu


# -----------------------------------------------------------------------------
# Kernels
# -----------------------------------------------------------------------------

def _onepass_kernel(x_ref, prm_ref, o_ref, *, inv_m, eps):
    """Single-pass BN (batch stats) + PReLU on a VMEM-resident channel tile.

    x_ref:   (N, tc, HW)   whole batch x spatial plane for `tc` channels
    prm_ref: (3, tc, 1)    rows = gamma, beta, alpha
    o_ref:   (N, tc, HW)
    """
    x = x_ref[...].astype(jnp.float32)          # no-op cast when already f32
    mean = jnp.sum(x, axis=(0, 2), keepdims=True) * inv_m        # (1, tc, 1)
    xc = x - mean
    var = jnp.sum(xc * xc, axis=(0, 2), keepdims=True) * inv_m   # centered
    inv_std = jax.lax.rsqrt(var + eps)
    g = prm_ref[0:1].astype(jnp.float32)
    b = prm_ref[1:2].astype(jnp.float32)
    a = prm_ref[2:3].astype(jnp.float32)
    y = xc * (g * inv_std) + b
    o_ref[...] = jnp.where(y > 0, y, a * y).astype(o_ref.dtype)


def _stats_kernel(x_ref, sum_ref, sumsq_ref):
    """Accumulate per-channel sum / sum-of-squares across the (n, hw) grid.

    x_ref: (1, tc, thw);  sum_ref / sumsq_ref: (1, tc, 1) resident outputs.
    """
    n = pl.program_id(1)
    m = pl.program_id(2)

    @pl.when(jnp.logical_and(n == 0, m == 0))
    def _init():
        sum_ref[...] = jnp.zeros_like(sum_ref)
        sumsq_ref[...] = jnp.zeros_like(sumsq_ref)

    x = x_ref[...].astype(jnp.float32)
    sum_ref[...] += jnp.sum(x, axis=(0, 2), keepdims=True)
    sumsq_ref[...] += jnp.sum(x * x, axis=(0, 2), keepdims=True)


def _apply_kernel(x_ref, prm_ref, o_ref):
    """y = x * scale + shift; PReLU.  prm rows = scale, shift, alpha (f32)."""
    x = x_ref[...].astype(jnp.float32)
    scale = prm_ref[0:1]
    shift = prm_ref[1:2]
    alpha = prm_ref[2:3]
    y = x * scale + shift
    o_ref[...] = jnp.where(y > 0, y, alpha * y).astype(o_ref.dtype)


# -----------------------------------------------------------------------------
# Tiling / budget helpers
# -----------------------------------------------------------------------------

_ONEPASS_BLOCK_BUDGET = 4 * 1024 * 1024   # f32 bytes of one resident block
_STREAM_BLOCK_BUDGET = 8 * 1024 * 1024    # f32 bytes of one streaming block
_SAFE_VMEM_LIMIT = 48 * 1024 * 1024       # fits v7x's 64 MiB physical VMEM


def _vmem_limit_bytes():
    """3/4 of physical VMEM (96 MiB on v5e/v6e, 48 MiB on v7x), safe fallback."""
    try:
        cap = int(pltpu.get_tpu_info().vmem_capacity_bytes)
        return min((cap * 3) // 4, 96 * 1024 * 1024)
    except Exception:  # pragma: no cover - conservative fallback
        return _SAFE_VMEM_LIMIT


def _best_tile(dim, base, cap):
    """Largest divisor of `dim` that is a multiple of `base` and <= cap."""
    best = None
    cap = min(dim, cap)
    d = base
    while d <= cap:
        if dim % d == 0:
            best = d
        d += base
    return best


def _pick_tc(C, sub, cap):
    """Channel tile: divisor of C, multiple of `sub`, <= cap; prefer >= 2 tiles
    so the 'parallel' channel axis feeds both v7x TensorCores."""
    cap = min(C, cap)
    t = _best_tile(C, sub, min(cap, C // 2)) if C // 2 >= sub else None
    if t is None:
        t = _best_tile(C, sub, cap)
    if t is None and C <= cap:
        t = C  # full-extent fallback (legal block dim even if not 8-aligned)
    return t


# -----------------------------------------------------------------------------
# Wrapper
# -----------------------------------------------------------------------------

def bnprelu(x, gamma, beta, alpha, *, eps=1e-3):
    """Training-mode BatchNorm2d(eps) + per-channel PReLU.

    x: [N, C, H, W] (NCHW); gamma/beta/alpha: [C].
    """
    N, C, H, W = x.shape
    HW = H * W
    M = N * HW
    inv_m = 1.0 / M

    x3 = x.reshape(N, C, HW)                       # free, contiguous reshape
    sub = 16 if x.dtype == jnp.bfloat16 else 8     # bf16 packs 2 rows/sublane
    vmem_limit = _vmem_limit_bytes()

    # ------------------ Path A: single-pass, VMEM-resident ------------------
    onepass_budget = min(_ONEPASS_BLOCK_BUDGET, vmem_limit // 8)
    plane_bytes = N * HW * 4                       # f32 bytes per channel row
    tc = _pick_tc(C, sub, onepass_budget // plane_bytes) \
        if plane_bytes <= onepass_budget else None

    if tc is not None:
        prm = jnp.stack(
            [gamma.astype(jnp.float32),
             beta.astype(jnp.float32),
             alpha.astype(jnp.float32)], axis=0).reshape(3, C, 1)
        out3 = pl.pallas_call(
            functools.partial(_onepass_kernel, inv_m=inv_m, eps=float(eps)),
            out_shape=jax.ShapeDtypeStruct((N, C, HW), x.dtype),
            grid=(C // tc,),
            in_specs=[
                pl.BlockSpec((N, tc, HW), lambda c: (0, c, 0)),
                pl.BlockSpec((3, tc, 1), lambda c: (0, c, 0)),
            ],
            out_specs=pl.BlockSpec((N, tc, HW), lambda c: (0, c, 0)),
            compiler_params=pltpu.CompilerParams(
                dimension_semantics=("parallel",),
                vmem_limit_bytes=vmem_limit,
            ),
        )(x3, prm)
        return out3.reshape(N, C, H, W)

    # ------------------ Path B: two-pass streaming ---------------------------
    # Lane tile: largest 128-multiple divisor of HW (lane-dense stores).
    thw = _best_tile(HW, 128, 8192)
    if thw is None:
        # TODO(synk): pad HW to a 128 multiple for fully lane-dense stores.
        thw = HW
    cap_tc = min(256, max(1, _STREAM_BLOCK_BUDGET // (thw * 4)))
    tc = _pick_tc(C, sub, cap_tc)
    if tc is None:
        tc = C

    grid = (C // tc, N, HW // thw)
    x_spec = pl.BlockSpec((1, tc, thw), lambda c, n, m: (n, c, m))
    stat_spec = pl.BlockSpec((1, tc, 1), lambda c, n, m: (0, c, 0))

    # Pass 1: per-channel sum / sumsq (accumulator outputs, reduction axes last).
    sums, sumsqs = pl.pallas_call(
        _stats_kernel,
        out_shape=(jax.ShapeDtypeStruct((1, C, 1), jnp.float32),
                   jax.ShapeDtypeStruct((1, C, 1), jnp.float32)),
        grid=grid,
        in_specs=[x_spec],
        out_specs=(stat_spec, stat_spec),
        compiler_params=pltpu.CompilerParams(
            dimension_semantics=("parallel", "arbitrary", "arbitrary"),
            vmem_limit_bytes=vmem_limit,
        ),
    )(x3)

    # Fold stats into a fused per-channel scale/shift (tiny [C] math in XLA).
    mean = sums.reshape(C) * inv_m
    var = jnp.maximum(sumsqs.reshape(C) * inv_m - mean * mean, 0.0)
    inv_std = jax.lax.rsqrt(var + eps)
    scale = gamma.astype(jnp.float32) * inv_std
    shift = beta.astype(jnp.float32) - mean * scale
    prm = jnp.stack([scale, shift, alpha.astype(jnp.float32)],
                    axis=0).reshape(3, C, 1)
    prm_spec = pl.BlockSpec((3, tc, 1), lambda c, n, m: (0, c, 0))

    # Pass 2: normalize + PReLU, fully parallel streaming.
    out3 = pl.pallas_call(
        _apply_kernel,
        out_shape=jax.ShapeDtypeStruct((N, C, HW), x.dtype),
        grid=grid,
        in_specs=[x_spec, prm_spec],
        out_specs=x_spec,
        compiler_params=pltpu.CompilerParams(
            dimension_semantics=("parallel", "parallel", "parallel"),
            vmem_limit_bytes=vmem_limit,
        ),
    )(x3, prm)
    return out3.reshape(N, C, H, W)


# -----------------------------------------------------------------------------
# Reference + test
# -----------------------------------------------------------------------------

def bnprelu_ref(x, gamma, beta, alpha, *, eps=1e-3):
    """Pure-JAX reference matching PyTorch BatchNorm2d(train, eps) + PReLU."""
    xf = x.astype(jnp.float32)
    mean = jnp.mean(xf, axis=(0, 2, 3), keepdims=True)
    var = jnp.mean((xf - mean) ** 2, axis=(0, 2, 3), keepdims=True)
    y = (xf - mean) / jnp.sqrt(var + eps)
    y = y * gamma.reshape(1, -1, 1, 1) + beta.reshape(1, -1, 1, 1)
    a = alpha.reshape(1, -1, 1, 1)
    return jnp.where(y > 0, y, a * y).astype(x.dtype)


if __name__ == "__main__":
    key = jax.random.PRNGKey(0)
    N, C, H, W = 2, 4, 16, 16

    kx, kg, kb, ka = jax.random.split(key, 4)
    x = jax.random.normal(kx, (N, C, H, W), dtype=jnp.float32)

    # BN default init is gamma=1, beta=0, PReLU slope=0.25; perturb slightly
    # (deterministically) so the test is non-trivial.
    gamma = 1.0 + 0.1 * jax.random.normal(kg, (C,), dtype=jnp.float32)
    beta = 0.1 * jax.random.normal(kb, (C,), dtype=jnp.float32)
    alpha = 0.25 + 0.05 * jax.random.normal(ka, (C,), dtype=jnp.float32)

    out = jax.block_until_ready(bnprelu(x, gamma, beta, alpha))
    ref = jax.block_until_ready(bnprelu_ref(x, gamma, beta, alpha))

    assert out.shape == (N, C, H, W)
    assert jnp.allclose(out, ref, atol=1e-4, rtol=1e-4), \
        float(jnp.max(jnp.abs(out - ref)))
    print("KERNEL_OK")
</pallas_src>

<mosaic_0001>
module attributes {stable_mosaic.version = 11 : i64} {
  func.func @_onepass_kernel(%arg0: i32, %arg1: memref<2x4x256xf32, #tpu.memory_space<vmem>>, %arg2: memref<3x4x1xf32, #tpu.memory_space<vmem>>, %arg3: memref<2x4x256xf32, #tpu.memory_space<vmem>>) attributes {dimension_semantics = [#tpu.dimension_semantics<parallel>], iteration_bounds = array<i64: 1>, scalar_prefetch = 0 : i64, scratch_operands = 0 : i64, tpu.core_type = #tpu.core_type<tc>, window_params = [{transform_indices = @transform_0, window_bounds = array<i64: 2, 4, 256>}, {transform_indices = @transform_1, window_bounds = array<i64: 3, 4, 1>}, {transform_indices = @transform_2, window_bounds = array<i64: 2, 4, 256>}]} {
    %c0 = arith.constant 0 : index
    %c0_0 = arith.constant 0 : index
    %c0_1 = arith.constant 0 : index
    %0 = vector.load %arg1[%c0, %c0_0, %c0_1] : memref<2x4x256xf32, #tpu.memory_space<vmem>>, vector<2x4x256xf32>
    %cst = arith.constant dense<0.000000e+00> : vector<4xf32>
    %1 = vector.multi_reduction <add>, %0, %cst [0, 2] : vector<2x4x256xf32> to vector<4xf32>
    %2 = vector.shape_cast %1 : vector<4xf32> to vector<1x4x1xf32>
    %cst_2 = arith.constant 0.001953125 : f32
    %3 = vector.broadcast %cst_2 : f32 to vector<1x4x1xf32>
    %4 = arith.mulf %2, %3 : vector<1x4x1xf32>
    %5 = vector.broadcast %4 : vector<1x4x1xf32> to vector<2x4x256xf32>
    %6 = arith.subf %0, %5 : vector<2x4x256xf32>
    %7 = arith.mulf %6, %6 : vector<2x4x256xf32>
    %cst_3 = arith.constant dense<0.000000e+00> : vector<4xf32>
    %8 = vector.multi_reduction <add>, %7, %cst_3 [0, 2] : vector<2x4x256xf32> to vector<4xf32>
    %9 = vector.shape_cast %8 : vector<4xf32> to vector<1x4x1xf32>
    %cst_4 = arith.constant 0.001953125 : f32
    %10 = vector.broadcast %cst_4 : f32 to vector<1x4x1xf32>
    %11 = arith.mulf %9, %10 : vector<1x4x1xf32>
    %cst_5 = arith.constant 1.000000e-03 : f32
    %12 = vector.broadcast %cst_5 : f32 to vector<1x4x1xf32>
    %13 = arith.addf %11, %12 : vector<1x4x1xf32>
    %14 = math.rsqrt %13 : vector<1x4x1xf32>
    %c0_6 = arith.constant 0 : index
    %c0_7 = arith.constant 0 : index
    %c0_8 = arith.constant 0 : index
    %15 = vector.load %arg2[%c0_6, %c0_7, %c0_8] : memref<3x4x1xf32, #tpu.memory_space<vmem>>, vector<1x4x1xf32>
    %c1 = arith.constant 1 : index
    %c0_9 = arith.constant 0 : index
    %c0_10 = arith.constant 0 : index
    %16 = vector.load %arg2[%c1, %c0_9, %c0_10] : memref<3x4x1xf32, #tpu.memory_space<vmem>>, vector<1x4x1xf32>
    %c2 = arith.constant 2 : index
    %c0_11 = arith.constant 0 : index
    %c0_12 = arith.constant 0 : index
    %17 = vector.load %arg2[%c2, %c0_11, %c0_12] : memref<3x4x1xf32, #tpu.memory_space<vmem>>, vector<1x4x1xf32>
    %18 = arith.mulf %15, %14 : vector<1x4x1xf32>
    %19 = vector.broadcast %18 : vector<1x4x1xf32> to vector<2x4x256xf32>
    %20 = arith.mulf %6, %19 : vector<2x4x256xf32>
    %21 = vector.broadcast %16 : vector<1x4x1xf32> to vector<2x4x256xf32>
    %22 = arith.addf %20, %21 : vector<2x4x256xf32>
    %cst_13 = arith.constant 0.000000e+00 : f32
    %23 = vector.broadcast %cst_13 : f32 to vector<2x4x256xf32>
    %24 = arith.cmpf ogt, %22, %23 : vector<2x4x256xf32>
    %25 = vector.broadcast %17 : vector<1x4x1xf32> to vector<2x4x256xf32>
    %26 = arith.mulf %25, %22 : vector<2x4x256xf32>
    %27 = arith.select %24, %22, %26 : vector<2x4x256xi1>, vector<2x4x256xf32>
    %c0_14 = arith.constant 0 : index
    %c0_15 = arith.constant 0 : index
    %c0_16 = arith.constant 0 : index
    %28 = vector.load %arg3[%c0_14, %c0_15, %c0_16] : memref<2x4x256xf32, #tpu.memory_space<vmem>>, vector<2x4x256xf32>
    tpu.vector_store %arg3[%c0_14, %c0_15, %c0_16], %27 {strides = array<i32>} : memref<2x4x256xf32, #tpu.memory_space<vmem>>, vector<2x4x256xf32>,
    return
  }
  func.func @transform_0(%arg0: i32) -> (i32, i32, i32) {
    %c0_i32 = arith.constant 0 : i32
    %c0_i32_0 = arith.constant 0 : i32
    %c0_i32_1 = arith.constant 0 : i32
    return %c0_i32, %arg0, %c0_i32_0 : i32, i32, i32
  }
  func.func @transform_1(%arg0: i32) -> (i32, i32, i32) {
    %c0_i32 = arith.constant 0 : i32
    %c0_i32_0 = arith.constant 0 : i32
    %c0_i32_1 = arith.constant 0 : i32
    return %c0_i32, %arg0, %c0_i32_0 : i32, i32, i32
  }
  func.func @transform_2(%arg0: i32) -> (i32, i32, i32) {
    %c0_i32 = arith.constant 0 : i32
    %c0_i32_0 = arith.constant 0 : i32
    %c0_i32_1 = arith.constant 0 : i32
    return %c0_i32, %arg0, %c0_i32_0 : i32, i32, i32
  }
}

</mosaic_0001>

<llo_original>
// kernel: tpu_custom_call.1
$region0: #{tpu_custom_call.1}
  #allocation0 [shape = 'u32[]', space=smem, size = 0x4, offset = 0x4, fixed_abs, tag = 'smem constant byte address 0x4 - core index']
  #allocation1 [shape = 'u32[144,128]{1,0:T(1,128)}', space=vmem, size = 0x12000, scoped, tag = 'internal scratch']
  %s0 = inlined_call_operand.hbm [shape: f32[2,4,256], index: 0, kind: input, shape index: {}]
  %s1 = inlined_call_operand.vmem [shape: f32[3,4,1], index: 1, kind: input, shape index: {}]
  %s2 = inlined_call_operand.hbm [shape: f32[2,4,256], index: 2, kind: output, shape index: {}]
  %s3 = sld [smem:[#allocation0]]
  $region22: #{tpu_custom_call.1} parent=0
    _
  %s5 = ssub.s32 1, %s3
  %s6 = scalar_select 0, %s5, %s3
  $region1: #{tpu_custom_call.1} parent=0
    #allocation2 [shape = 'u8[8192]{0}', space=vmem, size = 0x2000, scoped, tag = 'input window, operand 0, single buffered']
    #allocation3 [shape = 's32[1]{0}', space=sflag, size = 0x4, scoped, tag = 'scoped memory for tpu_custom_call.1']
    #allocation4 [shape = 's32[1]{0}', space=sflag, size = 0x4, scoped, tag = 'scoped memory for tpu_custom_call.1']
    #allocation5 [shape = 'u8[8192]{0}', space=vmem, size = 0x2000, scoped, tag = 'output window, operand 0, single buffered']
    %7 = vsyncpa [#allocation3], 0
    %8 = vsyncpa [#allocation4], 0
    // Predicated region
    $region2: #{tpu_custom_call.1} parent=1 // pred_check
      _
    $region3: #{tpu_custom_call.1} parent=1 // pred_check_branch
      %10 = sbr.rel (0) target = $region5
    $region4: #{tpu_custom_call.1} parent=1 // pred_region
      %s12 = ssub.s32 256, 256
      %13 = vsyncadd [#allocation3], %s12
      %s14 = sshll.u32 [#allocation2], 4
      %s15 = int_to_ptr.vmem [resolvable:$true] %s14
      %20 = dma.hbm_to_vmem [thread:$0]  %s0, 256, %s15, [#allocation3], 128, 128, 8
    $region5: #{tpu_custom_call.1} parent=1 // pred_fallthru
      _
    // Predicated region
    $region6: #{tpu_custom_call.1} parent=1 // pred_check
      _
    $region7: #{tpu_custom_call.1} parent=1 // pred_check_branch
      %22 = sbr.rel (0) target = $region9
    $region8: #{tpu_custom_call.1} parent=1 // pred_region
      _
    $region9: #{tpu_custom_call.1} parent=1 // pred_fallthru
      _
    // Predicated region
    $region10: #{tpu_custom_call.1} parent=1 // pred_check
      _
    $region11: #{tpu_custom_call.1} parent=1 // pred_check_branch
      %24 = sbr.rel (0) target = $region13
    $region12: #{tpu_custom_call.1} parent=1 // pred_region
      %25 = dma.done [#allocation3], 256
    $region13: #{tpu_custom_call.1} parent=1 // pred_fallthru
      _
    %v26 = vld [vmem:[#allocation2] sm:$0xff]
    %v27 = vld [vmem:[#allocation2 + $0x8] sm:$0xff]
    %v30 = vcombine.high %v26, %v26
    %v31 = vcombine.high %v27, %v27
    %vm34 = vcmask 1043456
    %v35 = vsel %vm34, %v26, 0.0
    %v36 = vsel %vm34, %v30, 0.0
    %v37 = vadd.f32 %v35, %v36
    %v38 = vsel %vm34, %v27, 0.0
    %v39 = vadd.f32 %v37, %v38
    %v40 = vsel %vm34, %v31, 0.0
    %v41 = vadd.f32 %v39, %v40
    %42 = vadd.xlane.f32.xlu0 %v41
    %v43 = vpop.xlane.xlu0 %42
    %v44 = vmul.f32 %v43, 0.001953125
    %v47 = vunpack.c.l.s4 839922192
    %v48 = vunpack.c.0.s8 %v47
    %v49 = vlaneseq
    %v50 = vshrl.u32 %v49, 7
    %v51 = vsub.s32 %v48, %v50
    %v52 = vrot.slane %v44, %v51
    %v54 = vsub.f32 %v26, %v52
    %v55 = vsub.f32 %v27, %v52
    %v56 = vmul.f32 %v54, %v54
    %v57 = vmul.f32 %v55, %v55
    %v60 = vcombine.high %v56, %v56
    %v61 = vcombine.high %v57, %v57
    %v64 = vsel %vm34, %v56, 0.0
    %v65 = vsel %vm34, %v60, 0.0
    %v66 = vadd.f32 %v64, %v65
    %v67 = vsel %vm34, %v57, 0.0
    %v68 = vadd.f32 %v66, %v67
    %v69 = vsel %vm34, %v61, 0.0
    %v70 = vadd.f32 %v68, %v69
    %71 = vadd.xlane.f32.xlu0 %v70
    %v72 = vpop.xlane.xlu0 %71
    %v73 = vmul.f32 %v72, 0.001953125
    %v74 = vadd.f32 %v73, 0.001
    %v75 = vrsqrt.pop %v74
    %v76 = vld [vmem:[%s1] sm:$0xf]
    %s77 = scalar_lea.vmem %s1, 4
    %v78 = vld [vmem:[%s77] sm:$0xf]
    %s79 = scalar_lea.vmem %s1, 8
    %v80 = vld [vmem:[%s79] sm:$0xf]
    %v81 = vmul.f32 %v76, %v75
    %83 = vset.pattern.permute.xlu0 0
    %84 = vperm.xlu0 %83, %v81
    %v85 = vpop.permute.xlu0 %84
    %v87 = vunpack.c.l.s4 839922192
    %v88 = vunpack.c.0.s8 %v87
    %v89 = vlaneseq
    %v90 = vshrl.u32 %v89, 7
    %v91 = vsub.s32 %v88, %v90
    %v92 = vrot.slane %v85, %v91
    %v94 = vmul.f32 %v54, %v92
    %v95 = vmul.f32 %v55, %v92
    %97 = vset.pattern.permute.xlu0 0
    %98 = vperm.xlu0 %97, %v78
    %v99 = vpop.permute.xlu0 %98
    %v101 = vunpack.c.l.s4 839922192
    %v102 = vunpack.c.0.s8 %v101
    %v103 = vlaneseq
    %v104 = vshrl.u32 %v103, 7
    %v105 = vsub.s32 %v102, %v104
    %v106 = vrot.slane %v99, %v105
    %v108 = vadd.f32 %v94, %v106
    %v109 = vadd.f32 %v95, %v106
    %vm110 = vcmp.gt.f32.partialorder %v108, 0.0
    %vm111 = vcmp.gt.f32.partialorder %v109, 0.0
    %113 = vset.pattern.permute.xlu0 0
    %114 = vperm.xlu0 %113, %v80
    %v115 = vpop.permute.xlu0 %114
    %v119 = vcombine.high %v108, %v108
    %v120 = vcombine.high %v109, %v109
    %v123 = vmul.f32 %v115, %v108
    %v124 = vmul.f32 %v115, %v119
    %v125 = vmul.f32 %v115, %v109
    %v126 = vmul.f32 %v115, %v120
    %v131 = vcombine.low %v123, %v124
    %v132 = vcombine.low %v125, %v126
    %v135 = vsel %vm110, %v108, %v131
    %v136 = vsel %vm111, %v109, %v132
    %137 = vst [vmem:[#allocation5] sm:$0xff] %v135
    %138 = vst [vmem:[#allocation5 + $0x8] sm:$0xff] %v136
    // Predicated region
    $region14: #{tpu_custom_call.1} parent=1 // pred_check
      _
    $region15: #{tpu_custom_call.1} parent=1 // pred_check_branch
      %140 = sbr.rel (0) target = $region17
    $region16: #{tpu_custom_call.1} parent=1 // pred_region
      %s142 = ssub.s32 256, 256
      %143 = vsyncadd [#allocation4], %s142
      %s144 = sshll.u32 [#allocation5], 4
      %s145 = int_to_ptr.vmem [resolvable:$true] %s144
      %150 = dma.vmem_to_hbm [thread:$0]  %s145, 256, %s2, [#allocation4], 128, 128, 8
    $region17: #{tpu_custom_call.1} parent=1 // pred_fallthru
      _
    // Predicated region
    $region18: #{tpu_custom_call.1} parent=1 // pred_check
      _
    $region19: #{tpu_custom_call.1} parent=1 // pred_check_branch
      %152 = sbr.rel (0) target = $region21
    $region20: #{tpu_custom_call.1} parent=1 // pred_region
      %153 = dma.done [#allocation4], 256
    $region21: #{tpu_custom_call.1} parent=1 // pred_fallthru
      _
    %154 = vsyncpa [#allocation3], 1
    %155 = vsyncpa [#allocation4], 1

</llo_original>
